<compile_context>
chip_gen: v5e
topology: v5e:2x2
jax: 0.10.0
libtpu: 0.0.40
codegen_flags: <defaults>
</compile_context>

<pallas_src>
import functools

import jax
import jax.numpy as jnp
from jax.experimental import pallas as pl
from jax.experimental.pallas import tpu as pltpu


_VMEM_LIMIT = 32 * 1024 * 1024     # safe on v5e/v6e (128 MiB phys) and v7x (64 MiB)
_TILE_BYTES = 4 * 1024 * 1024      # per-tile DMA budget, in native-dtype bytes
_FUSED_BYTES = 2 * 1024 * 1024     # cutoff for the single fused-kernel fast path


# --------------------------------------------------------------------------- #
# Kernels
# --------------------------------------------------------------------------- #
def _fused_kernel(x_ref, o_ref, *, inv_n):
    # Whole array resident in VMEM: one read, one write, mean in f32.
    xf = x_ref[...].astype(jnp.float32)
    mean = jnp.sum(xf) * inv_n
    o_ref[...] = (xf - mean).astype(o_ref.dtype)


def _sum_kernel(x_ref, sum_ref):
    # (1,1) f32 output block is resident across the whole sequential grid:
    # init once, accumulate per-tile partial sums.
    @pl.when((pl.program_id(0) == 0) & (pl.program_id(1) == 0))
    def _():
        sum_ref[...] = jnp.zeros_like(sum_ref)

    xf = x_ref[...].astype(jnp.float32)
    part = jnp.sum(xf, axis=1, keepdims=True)       # lane reduce    (rows, 1)
    sum_ref[...] += jnp.sum(part, axis=0, keepdims=True)  # sublane reduce (1, 1)


def _center_kernel(sum_ref, x_ref, o_ref, *, inv_n):
    # Scalar sum lives in SMEM; compile-time reciprocal multiply, then a
    # vector-scalar subtract; output written directly in the original dtype.
    mean = sum_ref[0, 0] * inv_n
    o_ref[...] = (x_ref[...].astype(jnp.float32) - mean).astype(o_ref.dtype)


# --------------------------------------------------------------------------- #
# Tiling helpers
# --------------------------------------------------------------------------- #
def _pick_block_2d(rows, cols, itemsize):
    """Pick a lane-dense (br, bc) tile that exactly divides (rows, cols)."""
    # Lane block: largest multiple of 128 dividing cols (capped at 2048 lanes).
    bc = 128
    d = 128
    while d <= min(cols, 2048):
        if cols % d == 0:
            bc = d
        d += 128
    # Row block: largest multiple of 8 dividing rows within the tile budget.
    max_rows = max(8, (_TILE_BYTES // (bc * itemsize)) // 8 * 8)
    br = 8
    r = 8
    while r <= min(rows, max_rows, 8192):
        if rows % r == 0:
            br = r
        r += 8
    return br, bc


def _two_pass_aligned(x2d, n, dtype):
    """Two-pass centered layer on a (rows%8==0, cols%128==0) 2-D array.

    `n` is the TRUE element count (padding, if any, contributes zero to the
    sum and is stripped by the caller)."""
    rows, cols = x2d.shape
    itemsize = jnp.dtype(dtype).itemsize
    br, bc = _pick_block_2d(rows, cols, itemsize)
    grid = (rows // br, cols // bc)
    n_tot = rows * cols

    # ---- pass 1: global f32 sum (sequential accumulator grid) -------------
    total = pl.pallas_call(
        _sum_kernel,
        out_shape=jax.ShapeDtypeStruct((1, 1), jnp.float32),
        grid=grid,
        in_specs=[pl.BlockSpec((br, bc), lambda i, j: (i, j))],
        out_specs=pl.BlockSpec((1, 1), lambda i, j: (0, 0)),
        compiler_params=pltpu.CompilerParams(
            dimension_semantics=("arbitrary", "arbitrary"),
            vmem_limit_bytes=_VMEM_LIMIT),
        cost_estimate=pl.CostEstimate(
            flops=n_tot, transcendentals=0,
            bytes_accessed=n_tot * itemsize + 4),
    )(x2d)

    # ---- pass 2: x - mean (independent tiles) ------------------------------
    out2d = pl.pallas_call(
        functools.partial(_center_kernel, inv_n=1.0 / float(n)),
        out_shape=jax.ShapeDtypeStruct((rows, cols), dtype),
        grid=grid,
        in_specs=[
            pl.BlockSpec(memory_space=pltpu.MemorySpace.SMEM),   # (1,1) sum
            pl.BlockSpec((br, bc), lambda i, j: (i, j)),
        ],
        out_specs=pl.BlockSpec((br, bc), lambda i, j: (i, j)),
        compiler_params=pltpu.CompilerParams(
            dimension_semantics=("parallel", "parallel"),
            vmem_limit_bytes=_VMEM_LIMIT),
        cost_estimate=pl.CostEstimate(
            flops=n_tot, transcendentals=0,
            bytes_accessed=2 * n_tot * itemsize + 4),
    )(total, x2d)
    return out2d


def _two_pass_padded(x2d, n, dtype):
    """Fallback for large ragged inputs: flatten, zero-pad, tile, slice."""
    lane = 512
    rows = pl.cdiv(pl.cdiv(n, lane), 8) * 8
    n_pad = rows * lane
    flat = x2d.reshape(-1)
    if n_pad != n:
        flat = jnp.pad(flat, (0, n_pad - n))        # zeros don't change the sum
    out2d = _two_pass_aligned(flat.reshape(rows, lane), n, dtype)
    return out2d.reshape(-1)[:n]


# --------------------------------------------------------------------------- #
# Public wrapper (== CenteredLayer.forward)
# --------------------------------------------------------------------------- #
def centered_layer(x):
    if x.ndim == 0:
        return x - x                                 # scalar: X - X.mean() == 0

    dtype = x.dtype
    n = x.size
    itemsize = jnp.dtype(dtype).itemsize

    cols = x.shape[-1]
    rows = n // cols
    x2d = x.reshape(rows, cols)                      # collapse leading dims (free)

    # Small-input fast path: one fused kernel, whole array in one VMEM tile.
    if n * itemsize <= _FUSED_BYTES:
        out2d = pl.pallas_call(
            functools.partial(_fused_kernel, inv_n=1.0 / float(n)),
            out_shape=jax.ShapeDtypeStruct((rows, cols), dtype),
            grid=(1,),
            in_specs=[pl.BlockSpec((rows, cols), lambda i: (0, 0))],
            out_specs=pl.BlockSpec((rows, cols), lambda i: (0, 0)),
            compiler_params=pltpu.CompilerParams(
                dimension_semantics=("arbitrary",),
                vmem_limit_bytes=_VMEM_LIMIT),
            cost_estimate=pl.CostEstimate(
                flops=2 * n, transcendentals=0,
                bytes_accessed=2 * n * itemsize),
        )(x2d)
        return out2d.reshape(x.shape)

    # Large, nicely aligned input: tile the original 2-D layout directly
    # (no pad / no relayout reshape / no output slice).
    if (cols % 128 == 0) and (rows % 8 == 0):
        return _two_pass_aligned(x2d, n, dtype).reshape(x.shape)

    # Large ragged input: rare fallback with explicit pad + slice.
    return _two_pass_padded(x2d, n, dtype).reshape(x.shape)


# --------------------------------------------------------------------------- #
# Self-test
# --------------------------------------------------------------------------- #
if __name__ == "__main__":
    key = jax.random.PRNGKey(0)
    k1, k2, k3, k4 = jax.random.split(key, 4)

    # Primary small case consistent with the module's forward: (batch=8, hidden=32).
    x_small = jax.random.normal(key, (8, 32), dtype=jnp.float32)
    out_small = centered_layer(x_small)
    jax.block_until_ready(out_small)
    ref_small = x_small - jnp.mean(x_small)
    assert jnp.allclose(out_small, ref_small, atol=1e-6), "mismatch (8,32)"
    assert abs(float(jnp.mean(out_small))) < 1e-5

    # Large aligned case: exercises the two-pass tiled path (6 MiB > fused cutoff).
    x_big = jax.random.normal(k1, (1024, 1536), dtype=jnp.float32)
    out_big = centered_layer(x_big)
    jax.block_until_ready(out_big)
    ref_big = x_big - jnp.mean(x_big)
    assert jnp.allclose(out_big, ref_big, atol=1e-5, rtol=1e-5), "mismatch (1024,1536)"

    # Small ragged case: fused path with non-(8,128)-aligned full block.
    x_odd = jax.random.normal(k2, (5, 37), dtype=jnp.float32)
    out_odd = centered_layer(x_odd)
    jax.block_until_ready(out_odd)
    ref_odd = x_odd - jnp.mean(x_odd)
    assert jnp.allclose(out_odd, ref_odd, atol=1e-6), "mismatch (5,37)"

    # Large ragged case: exercises the pad fallback path.
    x_rag = jax.random.normal(k3, (777, 1000), dtype=jnp.float32)
    out_rag = centered_layer(x_rag)
    jax.block_until_ready(out_rag)
    ref_rag = x_rag - jnp.mean(x_rag)
    assert jnp.allclose(out_rag, ref_rag, atol=1e-5, rtol=1e-5), "mismatch (777,1000)"

    # bf16 case: exercises native-dtype loads/stores with in-kernel f32 math.
    x_bf = jax.random.normal(k4, (64, 256), dtype=jnp.float32).astype(jnp.bfloat16)
    out_bf = centered_layer(x_bf)
    jax.block_until_ready(out_bf)
    xf = x_bf.astype(jnp.float32)
    ref_bf = xf - jnp.mean(xf)
    assert out_bf.dtype == jnp.bfloat16
    assert jnp.allclose(out_bf.astype(jnp.float32), ref_bf, atol=5e-2), "mismatch bf16"

    print("KERNEL_OK")
</pallas_src>

<mosaic_0001>
module attributes {stable_mosaic.version = 11 : i64} {
  func.func @_fused_kernel(%arg0: i32, %arg1: memref<8x32xf32, #tpu.memory_space<vmem>>, %arg2: memref<8x32xf32, #tpu.memory_space<vmem>>) attributes {dimension_semantics = [#tpu.dimension_semantics<arbitrary>], iteration_bounds = array<i64: 1>, scalar_prefetch = 0 : i64, scratch_operands = 0 : i64, tpu.core_type = #tpu.core_type<tc>, window_params = [{pipeline_mode = #tpu.pipeline_mode<synchronous>, transform_indices = @transform_0, window_bounds = array<i64: 8, 32>}, {pipeline_mode = #tpu.pipeline_mode<synchronous>, transform_indices = @transform_1, window_bounds = array<i64: 8, 32>}]} {
    %c0 = arith.constant 0 : index
    %c0_0 = arith.constant 0 : index
    %0 = vector.load %arg1[%c0, %c0_0] : memref<8x32xf32, #tpu.memory_space<vmem>>, vector<8x32xf32>
    %1 = vector.shape_cast %0 : vector<8x32xf32> to vector<1x8x32xf32>
    %cst = arith.constant dense<0.000000e+00> : vector<1xf32>
    %2 = vector.multi_reduction <add>, %1, %cst [1, 2] : vector<1x8x32xf32> to vector<1xf32>
    %3 = vector.shape_cast %2 : vector<1xf32> to vector<1x1x1xf32>
    %4 = vector.extract %3[0, 0, 0] : f32 from vector<1x1x1xf32>
    %cst_1 = arith.constant 3.906250e-03 : f32
    %5 = arith.mulf %4, %cst_1 : f32
    %6 = vector.broadcast %5 : f32 to vector<8x32xf32>
    %7 = arith.subf %0, %6 : vector<8x32xf32>
    %c0_2 = arith.constant 0 : index
    %c0_3 = arith.constant 0 : index
    %8 = vector.load %arg2[%c0_2, %c0_3] : memref<8x32xf32, #tpu.memory_space<vmem>>, vector<8x32xf32>
    tpu.vector_store %arg2[%c0_2, %c0_3], %7 {strides = array<i32>} : memref<8x32xf32, #tpu.memory_space<vmem>>, vector<8x32xf32>,
    return
  }
  func.func @transform_0(%arg0: i32) -> (i32, i32) {
    %c0_i32 = arith.constant 0 : i32
    %c0_i32_0 = arith.constant 0 : i32
    %c0_i32_1 = arith.constant 0 : i32
    return %c0_i32, %c0_i32_0 : i32, i32
  }
  func.func @transform_1(%arg0: i32) -> (i32, i32) {
    %c0_i32 = arith.constant 0 : i32
    %c0_i32_0 = arith.constant 0 : i32
    %c0_i32_1 = arith.constant 0 : i32
    return %c0_i32, %c0_i32_0 : i32, i32
  }
}

</mosaic_0001>

<llo_original>
// kernel: tpu_custom_call.1
$region0: #{tpu_custom_call.1}
  #allocation0 [shape = 'u32[]', space=smem, size = 0x4, offset = 0x4, fixed_abs, tag = 'smem constant byte address 0x4 - core index']
  #allocation1 [shape = 'u32[72,128]{1,0:T(1,128)}', space=vmem, size = 0x9000, scoped, tag = 'internal scratch']
  %s0 = inlined_call_operand.hbm [shape: f32[8,32], index: 0, kind: input, shape index: {}]
  %s1 = inlined_call_operand.hbm [shape: f32[8,32], index: 1, kind: output, shape index: {}]
  %s2 = sld [smem:[#allocation0]]
  $region18: #{tpu_custom_call.1} parent=0
    _
  %s4 = ssub.s32 1, %s2
  %s5 = scalar_select 0, %s4, %s2
  $region1: #{tpu_custom_call.1} parent=0
    #allocation2 [shape = 'u8[4096]{0}', space=vmem, size = 0x1000, scoped, tag = 'input window, operand 0, single buffered']
    #allocation3 [shape = 's32[1]{0}', space=sflag, size = 0x4, scoped, tag = 'scoped memory for tpu_custom_call.1']
    #allocation4 [shape = 's32[1]{0}', space=sflag, size = 0x4, scoped, tag = 'scoped memory for tpu_custom_call.1']
    #allocation5 [shape = 'u8[4096]{0}', space=vmem, size = 0x1000, scoped, tag = 'output window, operand 0, single buffered']
    %6 = vsyncpa [#allocation3], 0
    %7 = vsyncpa [#allocation4], 0
    // Predicated region
    $region2: #{tpu_custom_call.1} parent=1 // pred_check
      _
    $region3: #{tpu_custom_call.1} parent=1 // pred_check_branch
      %9 = sbr.rel (0) target = $region5
    $region4: #{tpu_custom_call.1} parent=1 // pred_region
      %11 = vsyncadd [#allocation3], 0
      %s13 = sshll.u32 %s0, 4
      %s14 = int_to_ptr.hbm [resolvable:$true] %s13
      %s15 = sshll.u32 [#allocation2], 4
      %s16 = int_to_ptr.vmem [resolvable:$true] %s15
      %18 = dma.hbm_to_vmem [thread:$0]  %s14, 128, %s16, [#allocation3]
    $region5: #{tpu_custom_call.1} parent=1 // pred_fallthru
      _
    // Predicated region
    $region6: #{tpu_custom_call.1} parent=1 // pred_check
      _
    $region7: #{tpu_custom_call.1} parent=1 // pred_check_branch
      %20 = sbr.rel (0) target = $region9
    $region8: #{tpu_custom_call.1} parent=1 // pred_region
      %22 = dma.done [#allocation3], 128
    $region9: #{tpu_custom_call.1} parent=1 // pred_fallthru
      _
    %v23 = vld [vmem:[#allocation2] sm:$0xff]
    %vm24 = vcmask 261120
    %v25 = vsel %vm24, %v23, 0.0
    %26 = vadd.xlane.f32.xlu0 %v25
    %v27 = vpop.xlane.xlu0 %26
    %v28 = vrot.slane %v27, 4
    %v29 = vadd.f32 %v27, %v28
    %v30 = vrot.slane %v29, 2
    %v31 = vadd.f32 %v29, %v30
    %v32 = vrot.slane %v31, 1
    %v33 = vadd.f32 %v31, %v32
    %s34 = vtos %v33
    %s35 = smul.f32 %s34, 0.00390625
    %v36 = vstv %s35
    %v37 = vsub.f32 %v23, %v36
    %38 = vst.msk [vmem:[#allocation5] sm:$0xff] %vm24, %v37
    // Predicated region
    $region10: #{tpu_custom_call.1} parent=1 // pred_check
      _
    $region11: #{tpu_custom_call.1} parent=1 // pred_check_branch
      %40 = sbr.rel (0) target = $region13
    $region12: #{tpu_custom_call.1} parent=1 // pred_region
      %42 = vsyncadd [#allocation4], 0
      %s44 = sshll.u32 [#allocation5], 4
      %s45 = int_to_ptr.vmem [resolvable:$true] %s44
      %s46 = sshll.u32 %s1, 4
      %s47 = int_to_ptr.hbm [resolvable:$true] %s46
      %49 = dma.vmem_to_hbm [thread:$0]  %s45, 128, %s47, [#allocation4]
    $region13: #{tpu_custom_call.1} parent=1 // pred_fallthru
      _
    // Predicated region
    $region14: #{tpu_custom_call.1} parent=1 // pred_check
      _
    $region15: #{tpu_custom_call.1} parent=1 // pred_check_branch
      %51 = sbr.rel (0) target = $region17
    $region16: #{tpu_custom_call.1} parent=1 // pred_region
      %53 = dma.done [#allocation4], 128
    $region17: #{tpu_custom_call.1} parent=1 // pred_fallthru
      _
    %54 = vsyncpa [#allocation3], 1
    %55 = vsyncpa [#allocation4], 1

</llo_original>
